<compile_context>
chip_gen: v7x
topology: tpu7x:2x2x1
jax: 0.10.0
libtpu: 0.0.40
codegen_flags: <defaults>
</compile_context>

<pallas_src>
import functools

import jax
import jax.numpy as jnp
from jax.experimental import pallas as pl
from jax.experimental.pallas import tpu as pltpu

LN_EPS = 1e-5  # PyTorch nn.LayerNorm default


def _round_up(x, m):
    return ((x + m - 1) // m) * m


def _layernorm(x, gamma, beta, real_d):
    """Single-pass LayerNorm over the last dim of a zero-padded activation.

    x: (B, D_pad) f32 where columns >= real_d are exactly zero, so sum(x) and
    sum(x*x) are exact sums over the real columns. gamma/beta are zero on the
    padded columns, which keeps padded output lanes at exactly zero."""
    inv_d = 1.0 / real_d
    s = jnp.sum(x, axis=-1, keepdims=True)
    s2 = jnp.sum(x * x, axis=-1, keepdims=True)
    mean = s * inv_d
    var = jnp.maximum(s2 * inv_d - mean * mean, 0.0)  # guard f32 cancellation
    return (x - mean) * jax.lax.rsqrt(var + LN_EPS) * gamma + beta


def _actor_kernel(x_ref, w1_ref, w2_ref, w3_ref, vec_ref, out_ref, *,
                  fc1, fc2, fc1p, fc2p, nap):
    x = x_ref[...]                      # (TB, OBS) bf16
    vecs = vec_ref[...]                 # (8, Dmax) f32 packed bias/LN params
    b1, g1, be1 = vecs[0:1, :fc1p], vecs[1:2, :fc1p], vecs[2:3, :fc1p]
    b2, g2, be2 = vecs[3:4, :fc2p], vecs[4:5, :fc2p], vecs[5:6, :fc2p]
    b3 = vecs[6:7, :nap]

    # fc1 -> layernorm -> relu  (bf16 matmul operands, f32 accumulate/elemwise)
    h = jnp.dot(x, w1_ref[...], preferred_element_type=jnp.float32) + b1
    h = jnp.maximum(_layernorm(h, g1, be1, fc1), 0.0)

    # fc2 -> layernorm -> relu
    h = jnp.dot(h.astype(jnp.bfloat16), w2_ref[...],
                preferred_element_type=jnp.float32) + b2
    h = jnp.maximum(_layernorm(h, g2, be2, fc2), 0.0)

    # mu -> tanh (lane-dense padded output; padded lanes are tanh(0)=0)
    h = jnp.dot(h.astype(jnp.bfloat16), w3_ref[...],
                preferred_element_type=jnp.float32) + b3
    out_ref[...] = jnp.tanh(h)


def _pick_tb(B, block_b):
    """Batch tile: full batch if tiny; otherwise aim for >=2 grid programs so
    the "parallel" batch axis can shard across both v7x TensorCores."""
    if B < 16:
        return B                               # block == full array dim (legal)
    half = pl.cdiv(B, 2)
    return min(block_b, _round_up(half, 8))


def actor_forward(state, params, *, block_b=512):
    """state: (B, obs_dim), bf16 preferred (f32 is cast once here).
    params: dict with bf16 zero-padded w1/w2/w3 stored (in, out_padded), an
    (8, Dmax) f32 'vecs' slab holding b1/g1/be1/b2/g2/be2/b3 (zero on padded
    lanes), and 'dims' = (fc1, fc2, n_action) real sizes."""
    B, obs = state.shape
    fc1, fc2, na = params["dims"]
    fc1p = params["w1"].shape[1]
    fc2p = params["w2"].shape[1]
    nap = params["w3"].shape[1]
    dmax = params["vecs"].shape[1]

    if state.dtype != jnp.bfloat16:
        # TODO(synk): feed bf16 state from the replay buffer / upstream layer to
        # halve the dominant HBM read instead of casting here.
        state = state.astype(jnp.bfloat16)

    tb = _pick_tb(B, block_b)
    grid = (pl.cdiv(B, tb),)

    # Explicit VMEM budget: double-buffered state/out tiles + resident bf16
    # weights + vecs slab + headroom for the f32 intermediates.  Clamp under
    # v7x's 64 MiB physical VMEM (scoped default is 32 MiB).
    weight_bytes = (obs * fc1p + fc1p * fc2p + fc2p * nap) * 2
    tile_bytes = 2 * tb * obs * 2 + 2 * tb * nap * 4 + 8 * dmax * 4
    interm_bytes = 3 * tb * max(fc1p, fc2p) * 4
    vmem_limit = int(min(60 * 2**20,
                         max(32 * 2**20,
                             1.5 * (weight_bytes + tile_bytes + interm_bytes))))

    kernel = functools.partial(_actor_kernel, fc1=fc1, fc2=fc2,
                               fc1p=fc1p, fc2p=fc2p, nap=nap)

    out = pl.pallas_call(
        kernel,
        out_shape=jax.ShapeDtypeStruct((B, nap), jnp.float32),
        grid_spec=pltpu.PrefetchScalarGridSpec(
            num_scalar_prefetch=0,
            grid=grid,
            in_specs=[
                pl.BlockSpec((tb, obs), lambda i: (i, 0)),     # state: batch-tiled
                pl.BlockSpec((obs, fc1p), lambda i: (0, 0)),   # w1: VMEM resident
                pl.BlockSpec((fc1p, fc2p), lambda i: (0, 0)),  # w2: VMEM resident
                pl.BlockSpec((fc2p, nap), lambda i: (0, 0)),   # w3: VMEM resident
                pl.BlockSpec((8, dmax), lambda i: (0, 0)),     # packed vectors
            ],
            out_specs=pl.BlockSpec((tb, nap), lambda i: (i, 0)),
        ),
        compiler_params=pltpu.CompilerParams(
            dimension_semantics=("parallel",),
            vmem_limit_bytes=vmem_limit,
        ),
    )(state, params["w1"], params["w2"], params["w3"], params["vecs"])

    # Lane-dense kernel output; real action slice taken outside the kernel.
    return out[:, :na]


def init_params(key, obs_dim, fc1dim, fc2dim, n_action):
    """Deterministic init mirroring the PyTorch module's __init__.

    Weights stored transposed (in, out), zero-padded on the output (and inner)
    dims to multiples of 128, and cast to bf16.  Biases / LayerNorm affine are
    packed into one (8, Dmax) f32 slab with zeros on all padded lanes."""
    k1, k2, k3, k4, k5 = jax.random.split(key, 5)

    fc1p = _round_up(fc1dim, 128)
    fc2p = _round_up(fc2dim, 128)
    nap = _round_up(n_action, 128)

    f1 = 1.0 / (obs_dim ** 0.5)
    f2 = 1.0 / (fc1dim ** 0.5)

    w1 = jax.random.uniform(k1, (obs_dim, fc1dim), jnp.float32, -f1, f1)
    # Spec: self.fc1.bias.data.uniform_(f_in, f_in) -> constant f_in.
    b1 = jnp.full((fc1dim,), f1, jnp.float32)
    w2 = jax.random.uniform(k2, (fc1dim, fc2dim), jnp.float32, -f2, f2)
    b2 = jax.random.uniform(k3, (fc2dim,), jnp.float32, -f2, f2)
    w3 = jax.random.uniform(k4, (fc2dim, n_action), jnp.float32, -0.003, 0.003)
    b3 = jax.random.uniform(k5, (n_action,), jnp.float32, -0.003, 0.003)

    # LayerNorm affine params (torch default: gamma=1, beta=0). Padded lanes
    # stay zero so padded activations remain exactly zero after each layer.
    g1 = jnp.ones((fc1dim,), jnp.float32)
    be1 = jnp.zeros((fc1dim,), jnp.float32)
    g2 = jnp.ones((fc2dim,), jnp.float32)
    be2 = jnp.zeros((fc2dim,), jnp.float32)

    # Zero-pad weights to lane-dense padded shapes.
    w1p = jnp.zeros((obs_dim, fc1p), jnp.float32).at[:, :fc1dim].set(w1)
    w2p = jnp.zeros((fc1p, fc2p), jnp.float32).at[:fc1dim, :fc2dim].set(w2)
    w3p = jnp.zeros((fc2p, nap), jnp.float32).at[:fc2dim, :n_action].set(w3)

    dmax = max(fc1p, fc2p, nap)

    def pad(v):
        return jnp.pad(v, (0, dmax - v.shape[0]))

    vecs = jnp.stack(
        [pad(b1), pad(g1), pad(be1),
         pad(b2), pad(g2), pad(be2),
         pad(b3), jnp.zeros((dmax,), jnp.float32)],
        axis=0,
    )  # (8, Dmax) f32

    return dict(
        w1=w1p.astype(jnp.bfloat16),
        w2=w2p.astype(jnp.bfloat16),
        w3=w3p.astype(jnp.bfloat16),
        vecs=vecs,
        dims=(fc1dim, fc2dim, n_action),
    )


def actor_forward_ref(state, params):
    """Pure-JAX reference performing the identical bf16-matmul / f32-elemwise
    math on the padded parameters."""
    fc1, fc2, na = params["dims"]
    fc1p = params["w1"].shape[1]
    fc2p = params["w2"].shape[1]
    nap = params["w3"].shape[1]
    v = params["vecs"]
    b1, g1, be1 = v[0:1, :fc1p], v[1:2, :fc1p], v[2:3, :fc1p]
    b2, g2, be2 = v[3:4, :fc2p], v[4:5, :fc2p], v[5:6, :fc2p]
    b3 = v[6:7, :nap]

    x = state.astype(jnp.bfloat16)
    h = jnp.dot(x, params["w1"], preferred_element_type=jnp.float32) + b1
    h = jnp.maximum(_layernorm(h, g1, be1, fc1), 0.0)
    h = jnp.dot(h.astype(jnp.bfloat16), params["w2"],
                preferred_element_type=jnp.float32) + b2
    h = jnp.maximum(_layernorm(h, g2, be2, fc2), 0.0)
    h = jnp.dot(h.astype(jnp.bfloat16), params["w3"],
                preferred_element_type=jnp.float32) + b3
    return jnp.tanh(h)[:, :na]


if __name__ == "__main__":
    # Small shapes consistent with the module: obs_shape=(16,), fc1dim=64,
    # fc2dim=32, n_action=4, batch=8.
    B, OBS, FC1, FC2, NA = 8, 16, 64, 32, 4

    key = jax.random.PRNGKey(0)
    k_state, k_params = jax.random.split(key)
    state = jax.random.normal(k_state, (B, OBS), jnp.float32).astype(jnp.bfloat16)
    params = init_params(k_params, OBS, FC1, FC2, NA)

    out = actor_forward(state, params)
    out = jax.block_until_ready(out)

    ref = actor_forward_ref(state, params)
    assert out.shape == (B, NA)
    assert jnp.allclose(out, ref, atol=1e-4, rtol=1e-4), "mismatch vs reference"

    print("KERNEL_OK")
</pallas_src>

<mosaic_0001>
module attributes {stable_mosaic.version = 11 : i64} {
  func.func @_actor_kernel(%arg0: i32, %arg1: memref<8x16xbf16, #tpu.memory_space<vmem>>, %arg2: memref<16x128xbf16, #tpu.memory_space<vmem>>, %arg3: memref<128x128xbf16, #tpu.memory_space<vmem>>, %arg4: memref<128x128xbf16, #tpu.memory_space<vmem>>, %arg5: memref<8x128xf32, #tpu.memory_space<vmem>>, %arg6: memref<8x128xf32, #tpu.memory_space<vmem>>) attributes {dimension_semantics = [#tpu.dimension_semantics<parallel>], iteration_bounds = array<i64: 1>, scalar_prefetch = 0 : i64, scratch_operands = 0 : i64, tpu.core_type = #tpu.core_type<tc>, window_params = [{transform_indices = @transform_0, window_bounds = array<i64: 8, 16>}, {pipeline_mode = #tpu.pipeline_mode<synchronous>, transform_indices = @transform_1, window_bounds = array<i64: 16, 128>}, {pipeline_mode = #tpu.pipeline_mode<synchronous>, transform_indices = @transform_2, window_bounds = array<i64: 128, 128>}, {pipeline_mode = #tpu.pipeline_mode<synchronous>, transform_indices = @transform_3, window_bounds = array<i64: 128, 128>}, {pipeline_mode = #tpu.pipeline_mode<synchronous>, transform_indices = @transform_4, window_bounds = array<i64: 8, 128>}, {transform_indices = @transform_5, window_bounds = array<i64: 8, 128>}]} {
    %c0 = arith.constant 0 : index
    %c0_0 = arith.constant 0 : index
    %0 = vector.load %arg1[%c0, %c0_0] : memref<8x16xbf16, #tpu.memory_space<vmem>>, vector<8x16xbf16>
    %c0_1 = arith.constant 0 : index
    %c0_2 = arith.constant 0 : index
    %1 = vector.load %arg5[%c0_1, %c0_2] : memref<8x128xf32, #tpu.memory_space<vmem>>, vector<8x128xf32>
    %2 = vector.extract_strided_slice %1 {offsets = [0, 0], sizes = [1, 128], strides = [1, 1]} : vector<8x128xf32> to vector<1x128xf32>
    %3 = vector.extract_strided_slice %1 {offsets = [1, 0], sizes = [1, 128], strides = [1, 1]} : vector<8x128xf32> to vector<1x128xf32>
    %4 = vector.extract_strided_slice %1 {offsets = [2, 0], sizes = [1, 128], strides = [1, 1]} : vector<8x128xf32> to vector<1x128xf32>
    %5 = vector.extract_strided_slice %1 {offsets = [3, 0], sizes = [1, 128], strides = [1, 1]} : vector<8x128xf32> to vector<1x128xf32>
    %6 = vector.extract_strided_slice %1 {offsets = [4, 0], sizes = [1, 128], strides = [1, 1]} : vector<8x128xf32> to vector<1x128xf32>
    %7 = vector.extract_strided_slice %1 {offsets = [5, 0], sizes = [1, 128], strides = [1, 1]} : vector<8x128xf32> to vector<1x128xf32>
    %8 = vector.extract_strided_slice %1 {offsets = [6, 0], sizes = [1, 128], strides = [1, 1]} : vector<8x128xf32> to vector<1x128xf32>
    %c0_3 = arith.constant 0 : index
    %c0_4 = arith.constant 0 : index
    %9 = vector.load %arg2[%c0_3, %c0_4] : memref<16x128xbf16, #tpu.memory_space<vmem>>, vector<16x128xbf16>
    %cst = arith.constant dense<0.000000e+00> : vector<8x128xf32>
    %10 = tpu.matmul %0, %9, %cst {dimension_numbers = #tpu.dot_dimension_numbers<[1], [0], [0], [1], [0, 0, 1, 1], [], []>} : vector<8x16xbf16>, vector<16x128xbf16>, vector<8x128xf32> -> vector<8x128xf32>
    %11 = vector.broadcast %2 : vector<1x128xf32> to vector<8x128xf32>
    %12 = arith.addf %10, %11 : vector<8x128xf32>
    %cst_5 = arith.constant dense<0.000000e+00> : vector<8xf32>
    %13 = vector.multi_reduction <add>, %12, %cst_5 [1] : vector<8x128xf32> to vector<8xf32>
    %14 = vector.shape_cast %13 : vector<8xf32> to vector<8x1xf32>
    %15 = arith.mulf %12, %12 : vector<8x128xf32>
    %cst_6 = arith.constant dense<0.000000e+00> : vector<8xf32>
    %16 = vector.multi_reduction <add>, %15, %cst_6 [1] : vector<8x128xf32> to vector<8xf32>
    %17 = vector.shape_cast %16 : vector<8xf32> to vector<8x1xf32>
    %cst_7 = arith.constant 1.562500e-02 : f32
    %18 = vector.broadcast %cst_7 : f32 to vector<8x1xf32>
    %19 = arith.mulf %14, %18 : vector<8x1xf32>
    %cst_8 = arith.constant 1.562500e-02 : f32
    %20 = vector.broadcast %cst_8 : f32 to vector<8x1xf32>
    %21 = arith.mulf %17, %20 : vector<8x1xf32>
    %22 = arith.mulf %19, %19 : vector<8x1xf32>
    %23 = arith.subf %21, %22 : vector<8x1xf32>
    %cst_9 = arith.constant 0.000000e+00 : f32
    %24 = vector.broadcast %cst_9 : f32 to vector<8x1xf32>
    %25 = arith.maximumf %23, %24 : vector<8x1xf32>
    %26 = vector.broadcast %19 : vector<8x1xf32> to vector<8x128xf32>
    %27 = arith.subf %12, %26 : vector<8x128xf32>
    %cst_10 = arith.constant 9.99999974E-6 : f32
    %28 = vector.broadcast %cst_10 : f32 to vector<8x1xf32>
    %29 = arith.addf %25, %28 : vector<8x1xf32>
    %30 = math.rsqrt %29 : vector<8x1xf32>
    %31 = vector.broadcast %30 : vector<8x1xf32> to vector<8x128xf32>
    %32 = arith.mulf %27, %31 : vector<8x128xf32>
    %33 = vector.broadcast %3 : vector<1x128xf32> to vector<8x128xf32>
    %34 = arith.mulf %32, %33 : vector<8x128xf32>
    %35 = vector.broadcast %4 : vector<1x128xf32> to vector<8x128xf32>
    %36 = arith.addf %34, %35 : vector<8x128xf32>
    %cst_11 = arith.constant 0.000000e+00 : f32
    %37 = vector.broadcast %cst_11 : f32 to vector<8x128xf32>
    %38 = arith.maximumf %36, %37 : vector<8x128xf32>
    %39 = arith.truncf %38 : vector<8x128xf32> to vector<8x128xbf16>
    %c0_12 = arith.constant 0 : index
    %c0_13 = arith.constant 0 : index
    %40 = vector.load %arg3[%c0_12, %c0_13] : memref<128x128xbf16, #tpu.memory_space<vmem>>, vector<128x128xbf16>
    %cst_14 = arith.constant dense<0.000000e+00> : vector<8x128xf32>
    %41 = tpu.matmul %39, %40, %cst_14 {dimension_numbers = #tpu.dot_dimension_numbers<[1], [0], [0], [1], [0, 0, 1, 1], [], []>} : vector<8x128xbf16>, vector<128x128xbf16>, vector<8x128xf32> -> vector<8x128xf32>
    %42 = vector.broadcast %5 : vector<1x128xf32> to vector<8x128xf32>
    %43 = arith.addf %41, %42 : vector<8x128xf32>
    %cst_15 = arith.constant dense<0.000000e+00> : vector<8xf32>
    %44 = vector.multi_reduction <add>, %43, %cst_15 [1] : vector<8x128xf32> to vector<8xf32>
    %45 = vector.shape_cast %44 : vector<8xf32> to vector<8x1xf32>
    %46 = arith.mulf %43, %43 : vector<8x128xf32>
    %cst_16 = arith.constant dense<0.000000e+00> : vector<8xf32>
    %47 = vector.multi_reduction <add>, %46, %cst_16 [1] : vector<8x128xf32> to vector<8xf32>
    %48 = vector.shape_cast %47 : vector<8xf32> to vector<8x1xf32>
    %cst_17 = arith.constant 3.125000e-02 : f32
    %49 = vector.broadcast %cst_17 : f32 to vector<8x1xf32>
    %50 = arith.mulf %45, %49 : vector<8x1xf32>
    %cst_18 = arith.constant 3.125000e-02 : f32
    %51 = vector.broadcast %cst_18 : f32 to vector<8x1xf32>
    %52 = arith.mulf %48, %51 : vector<8x1xf32>
    %53 = arith.mulf %50, %50 : vector<8x1xf32>
    %54 = arith.subf %52, %53 : vector<8x1xf32>
    %cst_19 = arith.constant 0.000000e+00 : f32
    %55 = vector.broadcast %cst_19 : f32 to vector<8x1xf32>
    %56 = arith.maximumf %54, %55 : vector<8x1xf32>
    %57 = vector.broadcast %50 : vector<8x1xf32> to vector<8x128xf32>
    %58 = arith.subf %43, %57 : vector<8x128xf32>
    %cst_20 = arith.constant 9.99999974E-6 : f32
    %59 = vector.broadcast %cst_20 : f32 to vector<8x1xf32>
    %60 = arith.addf %56, %59 : vector<8x1xf32>
    %61 = math.rsqrt %60 : vector<8x1xf32>
    %62 = vector.broadcast %61 : vector<8x1xf32> to vector<8x128xf32>
    %63 = arith.mulf %58, %62 : vector<8x128xf32>
    %64 = vector.broadcast %6 : vector<1x128xf32> to vector<8x128xf32>
    %65 = arith.mulf %63, %64 : vector<8x128xf32>
    %66 = vector.broadcast %7 : vector<1x128xf32> to vector<8x128xf32>
    %67 = arith.addf %65, %66 : vector<8x128xf32>
    %cst_21 = arith.constant 0.000000e+00 : f32
    %68 = vector.broadcast %cst_21 : f32 to vector<8x128xf32>
    %69 = arith.maximumf %67, %68 : vector<8x128xf32>
    %70 = arith.truncf %69 : vector<8x128xf32> to vector<8x128xbf16>
    %c0_22 = arith.constant 0 : index
    %c0_23 = arith.constant 0 : index
    %71 = vector.load %arg4[%c0_22, %c0_23] : memref<128x128xbf16, #tpu.memory_space<vmem>>, vector<128x128xbf16>
    %cst_24 = arith.constant dense<0.000000e+00> : vector<8x128xf32>
    %72 = tpu.matmul %70, %71, %cst_24 {dimension_numbers = #tpu.dot_dimension_numbers<[1], [0], [0], [1], [0, 0, 1, 1], [], []>} : vector<8x128xbf16>, vector<128x128xbf16>, vector<8x128xf32> -> vector<8x128xf32>
    %73 = vector.broadcast %8 : vector<1x128xf32> to vector<8x128xf32>
    %74 = arith.addf %72, %73 : vector<8x128xf32>
    %75 = math.tanh %74 : vector<8x128xf32>
    %c0_25 = arith.constant 0 : index
    %c0_26 = arith.constant 0 : index
    %76 = vector.load %arg6[%c0_25, %c0_26] : memref<8x128xf32, #tpu.memory_space<vmem>>, vector<8x128xf32>
    tpu.vector_store %arg6[%c0_25, %c0_26], %75 {strides = array<i32>} : memref<8x128xf32, #tpu.memory_space<vmem>>, vector<8x128xf32>,
    return
  }
  func.func @transform_0(%arg0: i32) -> (i32, i32) {
    %c0_i32 = arith.constant 0 : i32
    %c0_i32_0 = arith.constant 0 : i32
    return %arg0, %c0_i32 : i32, i32
  }
  func.func @transform_1(%arg0: i32) -> (i32, i32) {
    %c0_i32 = arith.constant 0 : i32
    %c0_i32_0 = arith.constant 0 : i32
    %c0_i32_1 = arith.constant 0 : i32
    return %c0_i32, %c0_i32_0 : i32, i32
  }
  func.func @transform_2(%arg0: i32) -> (i32, i32) {
    %c0_i32 = arith.constant 0 : i32
    %c0_i32_0 = arith.constant 0 : i32
    %c0_i32_1 = arith.constant 0 : i32
    return %c0_i32, %c0_i32_0 : i32, i32
  }
  func.func @transform_3(%arg0: i32) -> (i32, i32) {
    %c0_i32 = arith.constant 0 : i32
    %c0_i32_0 = arith.constant 0 : i32
    %c0_i32_1 = arith.constant 0 : i32
    return %c0_i32, %c0_i32_0 : i32, i32
  }
  func.func @transform_4(%arg0: i32) -> (i32, i32) {
    %c0_i32 = arith.constant 0 : i32
    %c0_i32_0 = arith.constant 0 : i32
    %c0_i32_1 = arith.constant 0 : i32
    return %c0_i32, %c0_i32_0 : i32, i32
  }
  func.func @transform_5(%arg0: i32) -> (i32, i32) {
    %c0_i32 = arith.constant 0 : i32
    %c0_i32_0 = arith.constant 0 : i32
    return %arg0, %c0_i32 : i32, i32
  }
}

</mosaic_0001>

<llo_original>
// kernel: tpu_custom_call.1
$region0: #{tpu_custom_call.1}
  #allocation0 [shape = 'u32[]', space=smem, size = 0x4, offset = 0x4, fixed_abs, tag = 'smem constant byte address 0x4 - core index']
  #allocation1 [shape = 'u32[144,128]{1,0:T(1,128)}', space=vmem, size = 0x12000, scoped, tag = 'internal scratch']
  %s0 = inlined_call_operand.hbm [shape: bf16[8,16], index: 0, kind: input, shape index: {}]
  %s1 = inlined_call_operand.hbm [shape: bf16[16,128], index: 1, kind: input, shape index: {}]
  %s2 = inlined_call_operand.hbm [shape: bf16[128,128], index: 2, kind: input, shape index: {}]
  %s3 = inlined_call_operand.hbm [shape: bf16[128,128], index: 3, kind: input, shape index: {}]
  %s4 = inlined_call_operand.vmem [shape: f32[8,128], index: 4, kind: input, shape index: {}]
  %s5 = inlined_call_operand.hbm [shape: f32[8,128], index: 5, kind: output, shape index: {}]
  %s6 = sld [smem:[#allocation0]]
  $region46: #{tpu_custom_call.1} parent=0
    _
  %s8 = ssub.s32 1, %s6
  %s9 = scalar_select 0, %s8, %s6
  $region1: #{tpu_custom_call.1} parent=0
    #allocation2 [shape = 'u8[2048]{0}', space=vmem, size = 0x800, scoped, tag = 'input window, operand 0, single buffered']
    #allocation3 [shape = 's32[1]{0}', space=sflag, size = 0x4, scoped, tag = 'scoped memory for tpu_custom_call.1']
    #allocation4 [shape = 's32[1]{0}', space=sflag, size = 0x4, scoped, tag = 'scoped memory for tpu_custom_call.1']
    #allocation5 [shape = 'u8[4096]{0}', space=vmem, size = 0x1000, scoped, tag = 'input window, operand 1, single buffered']
    #allocation6 [shape = 's32[1]{0}', space=sflag, size = 0x4, scoped, tag = 'scoped memory for tpu_custom_call.1']
    #allocation7 [shape = 'u8[32768]{0}', space=vmem, size = 0x8000, scoped, tag = 'input window, operand 2, single buffered']
    #allocation8 [shape = 'u8[32768]{0}', space=vmem, size = 0x8000, scoped, tag = 'input window, operand 3, single buffered']
    #allocation9 [shape = 's32[1]{0}', space=sflag, size = 0x4, scoped, tag = 'scoped memory for tpu_custom_call.1']
    #allocation10 [shape = 'u8[4096]{0}', space=vmem, size = 0x1000, scoped, tag = 'output window, operand 0, single buffered']
    %10 = vsyncpa [#allocation3], 0
    %11 = vsyncpa [#allocation6], 0
    %12 = vsyncpa [#allocation9], 0
    %13 = vsyncpa [#allocation4], 0
    // Predicated region
    $region2: #{tpu_custom_call.1} parent=1 // pred_check
      _
    $region3: #{tpu_custom_call.1} parent=1 // pred_check_branch
      %15 = sbr.rel (0) target = $region5
    $region4: #{tpu_custom_call.1} parent=1 // pred_region
      %s17 = ssub.s32 64, 64
      %18 = vsyncadd [#allocation3], %s17
      %s20 = sshll.u32 [#allocation2], 4
      %s21 = int_to_ptr.vmem [resolvable:$true] %s20
      %23 = dma.hbm_to_vmem [thread:$0]  %s0, 64, %s21, [#allocation3]
    $region5: #{tpu_custom_call.1} parent=1 // pred_fallthru
      _
    // Predicated region
    $region6: #{tpu_custom_call.1} parent=1 // pred_check
      _
    $region7: #{tpu_custom_call.1} parent=1 // pred_check_branch
      %25 = sbr.rel (0) target = $region9
    $region8: #{tpu_custom_call.1} parent=1 // pred_region
      %s27 = ssub.s32 128, 128
      %28 = vsyncadd [#allocation6], %s27
      %s29 = sshll.u32 [#allocation5], 4
      %s30 = int_to_ptr.vmem [resolvable:$true] %s29
      %35 = dma.hbm_to_vmem [thread:$0]  %s1, 128, %s30, [#allocation6], 64, 64, 4
    $region9: #{tpu_custom_call.1} parent=1 // pred_fallthru
      _
    // Predicated region
    $region10: #{tpu_custom_call.1} parent=1 // pred_check
      _
    $region11: #{tpu_custom_call.1} parent=1 // pred_check_branch
      %37 = sbr.rel (0) target = $region13
    $region12: #{tpu_custom_call.1} parent=1 // pred_region
      %s39 = ssub.s32 1024, 1024
      %40 = vsyncadd [#allocation6], %s39
      %s41 = sshll.u32 [#allocation7], 4
      %s42 = int_to_ptr.vmem [resolvable:$true] %s41
      %47 = dma.hbm_to_vmem [thread:$0]  %s2, 1024, %s42, [#allocation6], 64, 64, 4
    $region13: #{tpu_custom_call.1} parent=1 // pred_fallthru
      _
    // Predicated region
    $region14: #{tpu_custom_call.1} parent=1 // pred_check
      _
    $region15: #{tpu_custom_call.1} parent=1 // pred_check_branch
      %49 = sbr.rel (0) target = $region17
    $region16: #{tpu_custom_call.1} parent=1 // pred_region
      %s51 = ssub.s32 1024, 1024
      %52 = vsyncadd [#allocation9], %s51
      %s53 = sshll.u32 [#allocation8], 4
      %s54 = int_to_ptr.vmem [resolvable:$true] %s53
      %59 = dma.hbm_to_vmem [thread:$0]  %s3, 1024, %s54, [#allocation9], 64, 64, 4
    $region17: #{tpu_custom_call.1} parent=1 // pred_fallthru
      _
    // Predicated region
    $region18: #{tpu_custom_call.1} parent=1 // pred_check
      _
    $region19: #{tpu_custom_call.1} parent=1 // pred_check_branch
      %61 = sbr.rel (0) target = $region21
    $region20: #{tpu_custom_call.1} parent=1 // pred_region
      _
    $region21: #{tpu_custom_call.1} parent=1 // pred_fallthru
      _
    // Predicated region
    $region22: #{tpu_custom_call.1} parent=1 // pred_check
      _
    $region23: #{tpu_custom_call.1} parent=1 // pred_check_branch
      %63 = sbr.rel (0) target = $region25
    $region24: #{tpu_custom_call.1} parent=1 // pred_region
      %64 = dma.done [#allocation3], 64
    $region25: #{tpu_custom_call.1} parent=1 // pred_fallthru
      _
    // Predicated region
    $region26: #{tpu_custom_call.1} parent=1 // pred_check
      _
    $region27: #{tpu_custom_call.1} parent=1 // pred_check_branch
      %66 = sbr.rel (0) target = $region29
    $region28: #{tpu_custom_call.1} parent=1 // pred_region
      %67 = dma.done [#allocation6], 128
    $region29: #{tpu_custom_call.1} parent=1 // pred_fallthru
      _
    // Predicated region
    $region30: #{tpu_custom_call.1} parent=1 // pred_check
      _
    $region31: #{tpu_custom_call.1} parent=1 // pred_check_branch
      %69 = sbr.rel (0) target = $region33
    $region32: #{tpu_custom_call.1} parent=1 // pred_region
      %70 = dma.done [#allocation6], 1024
    $region33: #{tpu_custom_call.1} parent=1 // pred_fallthru
      _
    // Predicated region
    $region34: #{tpu_custom_call.1} parent=1 // pred_check
      _
    $region35: #{tpu_custom_call.1} parent=1 // pred_check_branch
      %72 = sbr.rel (0) target = $region37
    $region36: #{tpu_custom_call.1} parent=1 // pred_region
      %73 = dma.done [#allocation9], 1024
    $region37: #{tpu_custom_call.1} parent=1 // pred_fallthru
      _
    %v75 = vld [vmem:[#allocation2] sm:$0xf]
    %v76 = vld [vmem:[%s4] sm:$0xff]
    %v77 = vld [vmem:[#allocation5] sm:$0xf]
    %v78 = vld [vmem:[#allocation5 + $0x4] sm:$0xf]
    %v79 = vlaneseq
    %v80 = vshrl.u32 %v79, 7
    %v81 = vsub.s32 0, %v80
    %v82 = vrot.slane %v76, %v81
    %v85 = vunpack.c.l.b16 %v77
    %v86 = vunpack.c.l.b16 %v78
    %v87 = vpack.c.b16 %v86, %v85
    %vm89 = vcmask 130048
    %v91 = vsel %vm89, %v75, 0
    %93 = vmatprep.subr.bf16.mxu0 0
    %94 = vmatpush1.bf16.msra.mxu0 %v87
    %95 = vmatprep.subr.bf16.mxu0 0
    %96 = vmatpush1.bf16.msra.mxu0 0
    %97 = vmatprep.subr.bf16.mxu0 0
    %98 = vmatpush1.bf16.msra.mxu0 0
    %99 = vmatprep.subr.bf16.mxu0 0
    %100 = vmatpush1.bf16.msra.mxu0 0
    %101 = vmatprep.subr.bf16.mxu0 0
    %102 = vmatpush1.bf16.msra.mxu0 0
    %103 = vmatprep.subr.bf16.mxu0 0
    %104 = vmatpush1.bf16.msra.mxu0 0
    %105 = vmatprep.subr.bf16.mxu0 0
    %106 = vmatpush1.bf16.msra.mxu0 0
    %107 = vmatprep.subr.bf16.mxu0 0
    %108 = vmatpush1.bf16.msra.mxu0 0
    %109 = vmatprep.subr.bf16.mxu0 0
    %110 = vmatpush1.bf16.msra.mxu0 0
    %111 = vmatprep.subr.bf16.mxu0 0
    %112 = vmatpush1.bf16.msra.mxu0 0
    %113 = vmatprep.subr.bf16.mxu0 0
    %114 = vmatpush1.bf16.msra.mxu0 0
    %115 = vmatprep.subr.bf16.mxu0 0
    %116 = vmatpush1.bf16.msra.mxu0 0
    %117 = vmatprep.subr.bf16.mxu0 0
    %118 = vmatpush1.bf16.msra.mxu0 0
    %119 = vmatprep.subr.bf16.mxu0 0
    %120 = vmatpush1.bf16.msra.mxu0 0
    %121 = vmatprep.subr.bf16.mxu0 0
    %122 = vmatpush1.bf16.msra.mxu0 0
    %123 = vmatprep.subr.bf16.mxu0 0
    %124 = vmatpush1.bf16.msra.mxu0 0
    %125 = vmatprep.mubr.bf16.mxu0 0
    %126 = vmatmul.mubr.bf16.gmra.mrb[0].mxu0 %v91
    %v127 = vpop.f32.mrb[0].mxu0
    %v128 = vadd.f32 %v82, %v127
    %v129 = vpop.f32.mrb[0].mxu0
    %v130 = vpop.f32.mrb[0].mxu0
    %v131 = vpop.f32.mrb[0].mxu0
    %132 = vdwg.mxu0
    %133 = vadd.xlane.f32.xlu0 %v128
    %v134 = vpop.xlane.xlu0 %133
    %v135 = vmul.f32 %v128, %v128
    %136 = vadd.xlane.f32.xlu0 %v135
    %v137 = vpop.xlane.xlu0 %136
    %v138 = vmul.f32 %v134, 0.015625
    %v139 = vmul.f32 %v137, 0.015625
    %v140 = vmul.f32 %v138, %v138
    %v141 = vsub.f32 %v139, %v140
    %v142 = vmax.f32 %v141, 0.0
    %v143 = vsub.f32 %v128, %v138
    %v144 = vadd.f32 %v142, 1e-05
    %v145 = vrsqrt.pop %v144
    %v146 = vmul.f32 %v143, %v145
    %v147 = vlaneseq
    %v148 = vshrl.u32 %v147, 7
    %v149 = vsub.s32 1, %v148
    %v150 = vrot.slane %v76, %v149
    %v151 = vmul.f32 %v146, %v150
    %v152 = vlaneseq
    %v153 = vshrl.u32 %v152, 7
    %v154 = vsub.s32 2, %v153
    %v155 = vrot.slane %v76, %v154
    %v156 = vadd.f32 %v151, %v155
    %v157 = vmax.f32 %v156, 0.0
    %v158 = vpack.c.bf16 %v157, %v157
    %v159 = vld [vmem:[#allocation7] sm:$0xf]
    %v160 = vld [vmem:[#allocation7 + $0x4] sm:$0xf]
    %v161 = vld [vmem:[#allocation7 + $0x8] sm:$0xf]
    %v162 = vld [vmem:[#allocation7 + $0xc] sm:$0xf]
    %v163 = vld [vmem:[#allocation7 + $0x10] sm:$0xf]
    %v164 = vld [vmem:[#allocation7 + $0x14] sm:$0xf]
    %v165 = vld [vmem:[#allocation7 + $0x18] sm:$0xf]
    %v166 = vld [vmem:[#allocation7 + $0x1c] sm:$0xf]
    %v167 = vld [vmem:[#allocation7 + $0x20] sm:$0xf]
    %v168 = vld [vmem:[#allocation7 + $0x24] sm:$0xf]
    %v169 = vld [vmem:[#allocation7 + $0x28] sm:$0xf]
    %v170 = vld [vmem:[#allocation7 + $0x2c] sm:$0xf]
    %v171 = vld [vmem:[#allocation7 + $0x30] sm:$0xf]
    %v172 = vld [vmem:[#allocation7 + $0x34] sm:$0xf]
    %v173 = vld [vmem:[#allocation7 + $0x38] sm:$0xf]
    %v174 = vld [vmem:[#allocation7 + $0x3c] sm:$0xf]
    %v175 = vlaneseq
    %v176 = vshrl.u32 %v175, 7
    %v177 = vsub.s32 3, %v176
    %v178 = vrot.slane %v76, %v177
    %v195 = vunpack.c.l.b16 %v159
    %v196 = vunpack.c.l.b16 %v160
    %v197 = vunpack.c.l.b16 %v161
    %v198 = vunpack.c.l.b16 %v162
    %v199 = vunpack.c.l.b16 %v163
    %v200 = vunpack.c.l.b16 %v164
    %v201 = vunpack.c.l.b16 %v165
    %v202 = vunpack.c.l.b16 %v166
    %v203 = vunpack.c.l.b16 %v167
    %v204 = vunpack.c.l.b16 %v168
    %v205 = vunpack.c.l.b16 %v169
    %v206 = vunpack.c.l.b16 %v170
    %v207 = vunpack.c.l.b16 %v171
    %v208 = vunpack.c.l.b16 %v172
    %v209 = vunpack.c.l.b16 %v173
    %v210 = vunpack.c.l.b16 %v174
    %v211 = vpack.c.b16 %v196, %v195
    %v212 = vpack.c.b16 %v198, %v197
    %v213 = vpack.c.b16 %v200, %v199
    %v214 = vpack.c.b16 %v202, %v201
    %v215 = vpack.c.b16 %v204, %v203
    %v216 = vpack.c.b16 %v206, %v205
    %v217 = vpack.c.b16 %v208, %v207
    %v218 = vpack.c.b16 %v210, %v209
    %227 = vmatprep.subr.bf16.mxu0 0
    %228 = vmatpush1.bf16.msra.mxu0 %v211
    %229 = vmatprep.subr.bf16.mxu0 0
    %230 = vmatpush1.bf16.msra.mxu0 %v212
    %231 = vmatprep.subr.bf16.mxu0 0
    %232 = vmatpush1.bf16.msra.mxu0 %v213
    %233 = vmatprep.subr.bf16.mxu0 0
    %234 = vmatpush1.bf16.msra.mxu0 %v214
    %235 = vmatprep.subr.bf16.mxu0 0
    %236 = vmatpush1.bf16.msra.mxu0 %v215
    %237 = vmatprep.subr.bf16.mxu0 0
    %238 = vmatpush1.bf16.msra.mxu0 %v216
    %239 = vmatprep.subr.bf16.mxu0 0
    %240 = vmatpush1.bf16.msra.mxu0 %v217
    %241 = vmatprep.subr.bf16.mxu0 0
    %242 = vmatpush1.bf16.msra.mxu0 %v218
    %243 = vmatprep.subr.bf16.mxu0 0
    %244 = vmatpush1.bf16.msra.mxu0 0
    %245 = vmatprep.subr.bf16.mxu0 0
    %246 = vmatpush1.bf16.msra.mxu0 0
    %247 = vmatprep.subr.bf16.mxu0 0
    %248 = vmatpush1.bf16.msra.mxu0 0
    %249 = vmatprep.subr.bf16.mxu0 0
    %250 = vmatpush1.bf16.msra.mxu0 0
    %251 = vmatprep.subr.bf16.mxu0 0
    %252 = vmatpush1.bf16.msra.mxu0 0
    %253 = vmatprep.subr.bf16.mxu0 0
    %254 = vmatpush1.bf16.msra.mxu0 0
    %255 = vmatprep.subr.bf16.mxu0 0
    %256 = vmatpush1.bf16.msra.mxu0 0
    %257 = vmatprep.subr.bf16.mxu0 0
    %258 = vmatpush1.bf16.msra.mxu0 0
    %259 = vmatprep.mubr.bf16.mxu0 0
    %260 = vmatmul.mubr.bf16.gmra.mrb[0].mxu0 %v158
    %v261 = vpop.f32.mrb[0].mxu0
    %v262 = vadd.f32 %v178, %v261
    %v263 = vpop.f32.mrb[0].mxu0
    %v264 = vpop.f32.mrb[0].mxu0
    %v265 = vpop.f32.mrb[0].mxu0
    %266 = vdwg.mxu0
    %267 = vadd.xlane.f32.xlu0 %v262
    %v268 = vpop.xlane.xlu0 %267
    %v269 = vmul.f32 %v262, %v262
    %270 = vadd.xlane.f32.xlu0 %v269
    %v271 = vpop.xlane.xlu0 %270
    %v272 = vmul.f32 %v268, 0.03125
    %v273 = vmul.f32 %v271, 0.03125
    %v274 = vmul.f32 %v272, %v272
    %v275 = vsub.f32 %v273, %v274
    %v276 = vmax.f32 %v275, 0.0
    %v277 = vsub.f32 %v262, %v272
    %v278 = vadd.f32 %v276, 1e-05
    %v279 = vrsqrt.pop %v278
    %v280 = vmul.f32 %v277, %v279
    %v281 = vlaneseq
    %v282 = vshrl.u32 %v281, 7
    %v283 = vsub.s32 4, %v282
    %v284 = vrot.slane %v76, %v283
    %v285 = vmul.f32 %v280, %v284
    %v286 = vlaneseq
    %v287 = vshrl.u32 %v286, 7
    %v288 = vsub.s32 5, %v287
    %v289 = vrot.slane %v76, %v288
    %v290 = vadd.f32 %v285, %v289
    %v291 = vmax.f32 %v290, 0.0
    %v292 = vpack.c.bf16 %v291, %v291
    %v293 = vld [vmem:[#allocation8] sm:$0xf]
    %v294 = vld [vmem:[#allocation8 + $0x4] sm:$0xf]
    %v295 = vld [vmem:[#allocation8 + $0x8] sm:$0xf]
    %v296 = vld [vmem:[#allocation8 + $0xc] sm:$0xf]
    %v297 = vld [vmem:[#allocation8 + $0x10] sm:$0xf]
    %v298 = vld [vmem:[#allocation8 + $0x14] sm:$0xf]
    %v299 = vld [vmem:[#allocation8 + $0x18] sm:$0xf]
    %v300 = vld [vmem:[#allocation8 + $0x1c] sm:$0xf]
    %v301 = vld [vmem:[#allocation8 + $0x20] sm:$0xf]
    %v302 = vld [vmem:[#allocation8 + $0x24] sm:$0xf]
    %v303 = vld [vmem:[#allocation8 + $0x28] sm:$0xf]
    %v304 = vld [vmem:[#allocation8 + $0x2c] sm:$0xf]
    %v305 = vld [vmem:[#allocation8 + $0x30] sm:$0xf]
    %v306 = vld [vmem:[#allocation8 + $0x34] sm:$0xf]
    %v307 = vld [vmem:[#allocation8 + $0x38] sm:$0xf]
    %v308 = vld [vmem:[#allocation8 + $0x3c] sm:$0xf]
    %v309 = vlaneseq
    %v310 = vshrl.u32 %v309, 7
    %v311 = vsub.s32 6, %v310
    %v312 = vrot.slane %v76, %v311
    %v329 = vunpack.c.l.b16 %v293
    %v330 = vunpack.c.l.b16 %v294
    %v331 = vunpack.c.l.b16 %v295
    %v332 = vunpack.c.l.b16 %v296
    %v333 = vunpack.c.l.b16 %v297
    %v334 = vunpack.c.l.b16 %v298
    %v335 = vunpack.c.l.b16 %v299
    %v336 = vunpack.c.l.b16 %v300
    %v337 = vunpack.c.l.b16 %v301
    %v338 = vunpack.c.l.b16 %v302
    %v339 = vunpack.c.l.b16 %v303
    %v340 = vunpack.c.l.b16 %v304
    %v341 = vunpack.c.l.b16 %v305
    %v342 = vunpack.c.l.b16 %v306
    %v343 = vunpack.c.l.b16 %v307
    %v344 = vunpack.c.l.b16 %v308
    %v345 = vpack.c.b16 %v330, %v329
    %v346 = vpack.c.b16 %v332, %v331
    %v347 = vpack.c.b16 %v334, %v333
    %v348 = vpack.c.b16 %v336, %v335
    %v349 = vpack.c.b16 %v338, %v337
    %v350 = vpack.c.b16 %v340, %v339
    %v351 = vpack.c.b16 %v342, %v341
    %v352 = vpack.c.b16 %v344, %v343
    %361 = vmatprep.subr.bf16.mxu0 0
    %362 = vmatpush1.bf16.msra.mxu0 %v345
    %363 = vmatprep.subr.bf16.mxu0 0
    %364 = vmatpush1.bf16.msra.mxu0 %v346
    %365 = vmatprep.subr.bf16.mxu0 0
    %366 = vmatpush1.bf16.msra.mxu0 %v347
    %367 = vmatprep.subr.bf16.mxu0 0
    %368 = vmatpush1.bf16.msra.mxu0 %v348
    %369 = vmatprep.subr.bf16.mxu0 0
    %370 = vmatpush1.bf16.msra.mxu0 %v349
    %371 = vmatprep.subr.bf16.mxu0 0
    %372 = vmatpush1.bf16.msra.mxu0 %v350
    %373 = vmatprep.subr.bf16.mxu0 0
    %374 = vmatpush1.bf16.msra.mxu0 %v351
    %375 = vmatprep.subr.bf16.mxu0 0
    %376 = vmatpush1.bf16.msra.mxu0 %v352
    %377 = vmatprep.subr.bf16.mxu0 0
    %378 = vmatpush1.bf16.msra.mxu0 0
    %379 = vmatprep.subr.bf16.mxu0 0
    %380 = vmatpush1.bf16.msra.mxu0 0
    %381 = vmatprep.subr.bf16.mxu0 0
    %382 = vmatpush1.bf16.msra.mxu0 0
    %383 = vmatprep.subr.bf16.mxu0 0
    %384 = vmatpush1.bf16.msra.mxu0 0
    %385 = vmatprep.subr.bf16.mxu0 0
    %386 = vmatpush1.bf16.msra.mxu0 0
    %387 = vmatprep.subr.bf16.mxu0 0
    %388 = vmatpush1.bf16.msra.mxu0 0
    %389 = vmatprep.subr.bf16.mxu0 0
    %390 = vmatpush1.bf16.msra.mxu0 0
    %391 = vmatprep.subr.bf16.mxu0 0
    %392 = vmatpush1.bf16.msra.mxu0 0
    %393 = vmatprep.mubr.bf16.mxu0 0
    %394 = vmatmul.mubr.bf16.gmra.mrb[0].mxu0 %v292
    %v395 = vpop.f32.mrb[0].mxu0
    %v396 = vadd.f32 %v312, %v395
    %v397 = vpop.f32.mrb[0].mxu0
    %v398 = vpop.f32.mrb[0].mxu0
    %v399 = vpop.f32.mrb[0].mxu0
    %400 = vdwg.mxu0
    %v401 = vtanh.pop %v396
    %402 = vst [vmem:[#allocation10] sm:$0xff] %v401
    // Predicated region
    $region38: #{tpu_custom_call.1} parent=1 // pred_check
      _
    $region39: #{tpu_custom_call.1} parent=1 // pred_check_branch
      %404 = sbr.rel (0) target = $region41
    $region40: #{tpu_custom_call.1} parent=1 // pred_region
      %s406 = ssub.s32 128, 128
      %407 = vsyncadd [#allocation4], %s406
      %s409 = sshll.u32 [#allocation10], 4
      %s410 = int_to_ptr.vmem [resolvable:$true] %s409
      %412 = dma.vmem_to_hbm [thread:$0]  %s410, 128, %s5, [#allocation4]
    $region41: #{tpu_custom_call.1} parent=1 // pred_fallthru
      _
    // Predicated region
    $region42: #{tpu_custom_call.1} parent=1 // pred_check
      _
    $region43: #{tpu_custom_call.1} parent=1 // pred_check_branch
      %414 = sbr.rel (0) target = $region45
    $region44: #{tpu_custom_call.1} parent=1 // pred_region
      %415 = dma.done [#allocation4], 128
    $region45: #{tpu_custom_call.1} parent=1 // pred_fallthru
      _
    %416 = vsyncpa [#allocation3], 1
    %417 = vsyncpa [#allocation6], 1
    %418 = vsyncpa [#allocation9], 1
    %419 = vsyncpa [#allocation4], 1

</llo_original>
